<compile_context>
chip_gen: v5e
topology: v5e:2x2
jax: 0.10.0
libtpu: 0.0.40
codegen_flags: <defaults>
</compile_context>

<pallas_src>
import functools

import jax
import jax.numpy as jnp
from jax.experimental import pallas as pl
from jax.experimental.pallas import tpu as pltpu

EPS = 1e-5


# ---------------------------------------------------------------------------
# Pallas kernel: 3 band-batched K=3C MXU dots (kh = 0, 1, 2) + fused LayerNorm
# ---------------------------------------------------------------------------
def _make_kernel(band, wop, c):
    n_main = (band - 1) * wop

    def kernel(a0_ref, a0h_ref, a1_ref, w_ref, g_ref, b_ref, o_ref, acc_ref):
        # a0_ref : (1, band*Wop, 3C) row-parity-0 width-tap tiles (output rows [r0, r0+band))
        # a0h_ref: (1, Wop, 3C)      halo: row-parity-0 tiles of output row r0+band
        # a1_ref : (1, band*Wop, 3C) row-parity-1 width-tap tiles
        # w_ref  : (3, 3C, C)        folded conv weight, one (3C, C) slab per kh
        # g_ref, b_ref : (1, C)      LayerNorm affine params
        # o_ref  : (1, band*Wop, C)  output block
        # acc_ref: (band*Wop, C)     f32 VMEM accumulator
        a0 = a0_ref[0]
        a1 = a1_ref[0]
        h0 = a0h_ref[0]

        # kh = 0 and kh = 1 tap groups: one big dot each (M = band*Wop, K = 3C).
        acc_ref[...] = jnp.dot(a0, w_ref[0], preferred_element_type=jnp.float32)
        acc_ref[...] += jnp.dot(a1, w_ref[1], preferred_element_type=jnp.float32)

        # kh = 2 reads row-parity-0 rows shifted down by one output row:
        # rows [Wop, band*Wop) of the main block plus the 1-row halo block.
        # Both slices/stores are sublane-aligned (Wop is a multiple of 8).
        if band > 1:
            acc_ref[0:n_main, :] += jnp.dot(
                a0[wop:, :], w_ref[2], preferred_element_type=jnp.float32)
        acc_ref[n_main:, :] += jnp.dot(
            h0, w_ref[2], preferred_element_type=jnp.float32)

        # Fused LayerNorm over channels (f32 math, EUP rsqrt), single-pass
        # sums with the variance clamped at 0 to guard f32 rounding.
        acc = acc_ref[...]
        gamma = g_ref[...].astype(jnp.float32)
        beta = b_ref[...].astype(jnp.float32)
        inv_c = jnp.float32(1.0 / c)
        mean = jnp.sum(acc, axis=-1, keepdims=True) * inv_c
        var = jnp.sum(acc * acc, axis=-1, keepdims=True) * inv_c - mean * mean
        var = jnp.maximum(var, 0.0)
        y = (acc - mean) * jax.lax.rsqrt(var + EPS)
        y = y * gamma + beta
        o_ref[0] = y.astype(o_ref.dtype)

    return kernel


# ---------------------------------------------------------------------------
# Band / VMEM sizing (generation aware)
# ---------------------------------------------------------------------------
def _vmem_capacity_bytes():
    try:
        return int(pltpu.get_tpu_info().vmem_capacity_bytes)
    except Exception:
        return 64 * 1024 * 1024        # v7x-safe default


def _pick_band(*, b, ho, wop, c, cd_itemsize, out_itemsize):
    cap = _vmem_capacity_bytes()
    # Tighter working-set budget on 64 MiB parts (v7x), larger on 128 MiB parts.
    budget = (24 << 20) if cap <= (64 << 20) else (48 << 20)

    weight_bytes = 9 * c * c * cd_itemsize
    single_buffer_weight = weight_bytes > (4 << 20)
    w_bufs = 1 if single_buffer_weight else 2

    def need(band):
        blk_a = band * wop * 3 * c * cd_itemsize       # A0 / A1 main blocks
        blk_halo = wop * 3 * c * cd_itemsize
        blk_out = band * wop * c * out_itemsize
        acc = band * wop * c * 4                       # f32 accumulator scratch
        # 2x for the double-buffered pipelined blocks, + a temporaries fudge.
        return (2 * (2 * blk_a + blk_halo + blk_out) + w_bufs * weight_bytes
                + acc + blk_a + (1 << 20))

    max_band = ho
    if b == 1 and ho >= 2:
        # Guarantee >= 2 grid steps so the v7x 2-TC megacore has parallel work.
        max_band = max(1, ho // 2)

    band = 1
    for cand in range(1, max_band + 1):
        if ho % cand == 0 and need(cand) <= budget:
            band = cand

    vmem_limit = int(min(cap - (2 << 20),
                         max(need(band) + (16 << 20), 32 << 20)))
    return band, vmem_limit, single_buffer_weight


def _weight_spec(c, single_buffer):
    if single_buffer and hasattr(pl, "Buffered"):
        try:
            # Constant across the grid; avoid a second 9*C^2 VMEM copy.
            return pl.BlockSpec((3, 3 * c, c), lambda bi, i: (0, 0, 0),
                                pipeline_mode=pl.Buffered(1))
        except Exception:
            pass
    return pl.BlockSpec((3, 3 * c, c), lambda bi, i: (0, 0, 0))


# ---------------------------------------------------------------------------
# pallas_call wrapper
# ---------------------------------------------------------------------------
def _conv_ln_fused(a0, a1, wf, gamma2, beta2, *, b, ho, wop, c, band,
                   out_dtype, vmem_limit, single_buffer_weight):
    nbands = ho // band
    kernel = _make_kernel(band, wop, c)

    cd_size = a0.dtype.itemsize
    flops = 2 * b * ho * wop * 9 * c * c
    bytes_accessed = (a0.size * cd_size + a1.size * cd_size
                      + b * nbands * wop * 3 * c * cd_size      # halo re-reads
                      + wf.size * wf.dtype.itemsize
                      + b * ho * wop * c * jnp.dtype(out_dtype).itemsize)

    return pl.pallas_call(
        kernel,
        out_shape=jax.ShapeDtypeStruct((b, ho * wop, c), out_dtype),
        grid_spec=pltpu.PrefetchScalarGridSpec(
            num_scalar_prefetch=0,
            grid=(b, nbands),
            in_specs=[
                # row-parity-0 main band
                pl.BlockSpec((1, band * wop, 3 * c), lambda bi, i: (bi, i, 0)),
                # row-parity-0 halo (one output row below the band)
                pl.BlockSpec((1, wop, 3 * c),
                             lambda bi, i: (bi, (i + 1) * band, 0)),
                # row-parity-1 main band
                pl.BlockSpec((1, band * wop, 3 * c), lambda bi, i: (bi, i, 0)),
                _weight_spec(c, single_buffer_weight),
                pl.BlockSpec((1, c), lambda bi, i: (0, 0)),
                pl.BlockSpec((1, c), lambda bi, i: (0, 0)),
            ],
            out_specs=pl.BlockSpec((1, band * wop, c), lambda bi, i: (bi, i, 0)),
            scratch_shapes=[pltpu.VMEM((band * wop, c), jnp.float32)],
        ),
        compiler_params=pltpu.CompilerParams(
            dimension_semantics=("parallel", "parallel"),
            vmem_limit_bytes=vmem_limit,
        ),
        cost_estimate=pl.CostEstimate(
            flops=flops,
            transcendentals=b * ho * wop,
            bytes_accessed=bytes_accessed),
    )(a0, a0, a1, wf, gamma2, beta2)


# ---------------------------------------------------------------------------
# Glue (plain JAX): inverse permutation, pad, width-tap / row-parity layout
# ---------------------------------------------------------------------------
def _inverse_permutation(sorted_index):
    # inverse[b, sorted_index[b, i]] = i   (scatter of iota; no argsort)
    b, l = sorted_index.shape
    iota = jnp.broadcast_to(jnp.arange(l, dtype=sorted_index.dtype), (b, l))
    inv = jnp.zeros_like(sorted_index)
    return inv.at[jnp.arange(b)[:, None], sorted_index].set(iota)


def seq_resize(x, sorted_index, patch_size):
    b, l, c = x.shape
    inv = _inverse_permutation(sorted_index)
    restored = jnp.take_along_axis(x, inv[..., None], axis=1)
    return restored.reshape(b, patch_size, patch_size, c)


@functools.partial(jax.jit, static_argnames=("patch_size", "compute_dtype"))
def downsample_layer(x, sorted_index, conv_w, gamma, beta, *, patch_size,
                     compute_dtype=None):
    b, l, c = x.shape
    h = w = patch_size
    ho, wo = (h + 1) // 2, (w + 1) // 2
    wop = max(8, ((wo + 7) // 8) * 8)          # sublane-friendly padded Wo

    if compute_dtype is None:
        cd = jnp.dtype(jnp.bfloat16) if c >= 128 else jnp.dtype(x.dtype)
    else:
        cd = jnp.dtype(compute_dtype)
    out_dtype = x.dtype

    # 1) restore sequence order, reshape to image, cast once to compute dtype
    x_hw = seq_resize(x, sorted_index, patch_size).astype(cd)   # (B, H, W, C)

    # 2) zero-pad so padded rows cover [0, 2*Ho] and cols cover [0, 2*Wop]
    x_pad = jnp.pad(x_hw, ((0, 0), (1, 2 * ho - h), (1, 2 * wop - w), (0, 0)))

    # 3) width-direction tap gather (kw = 0,1,2) folded into the channel dim
    t0 = x_pad[:, :, 0:2 * wop:2, :]
    t1 = x_pad[:, :, 1:2 * wop:2, :]
    t2 = x_pad[:, :, 2:2 * wop + 2:2, :]
    a = jnp.concatenate([t0, t1, t2], axis=-1)   # (B, 2*Ho+1, Wop, 3C)

    # 4) row-parity split + flatten (row, ow) so a band block is a contiguous M run
    a0 = a[:, 0::2].reshape(b, (ho + 1) * wop, 3 * c)   # rp=0: kh = 0 and kh = 2
    a1 = a[:, 1::2].reshape(b, ho * wop, 3 * c)         # rp=1: kh = 1

    # 5) fold conv weight (Cout, Cin, 3, 3) -> (kh, kw*Cin, Cout)
    wf = jnp.transpose(conv_w, (2, 3, 1, 0)).reshape(3, 3 * c, c).astype(cd)

    band, vmem_limit, single_buffer_weight = _pick_band(
        b=b, ho=ho, wop=wop, c=c, cd_itemsize=cd.itemsize,
        out_itemsize=jnp.dtype(out_dtype).itemsize)

    out = _conv_ln_fused(
        a0, a1, wf, gamma.reshape(1, -1), beta.reshape(1, -1),
        b=b, ho=ho, wop=wop, c=c, band=band, out_dtype=out_dtype,
        vmem_limit=vmem_limit, single_buffer_weight=single_buffer_weight)

    return out.reshape(b, ho, wop, c)[:, :, :wo, :]


# ---------------------------------------------------------------------------
# Pure-JAX reference for the correctness check (uses argsort independently)
# ---------------------------------------------------------------------------
def reference(x, sorted_index, conv_w, gamma, beta, patch_size):
    b, l, c = x.shape
    inv = jnp.argsort(sorted_index, axis=1)
    restored = jnp.take_along_axis(x, inv[..., None], axis=1)
    x_hw = restored.reshape(b, patch_size, patch_size, c)
    x_nchw = jnp.transpose(x_hw, (0, 3, 1, 2))
    y = jax.lax.conv_general_dilated(
        x_nchw, conv_w, window_strides=(2, 2), padding=((1, 1), (1, 1)),
        dimension_numbers=("NCHW", "OIHW", "NCHW"))
    y = jnp.transpose(y, (0, 2, 3, 1))
    mean = y.mean(-1, keepdims=True)
    var = ((y - mean) ** 2).mean(-1, keepdims=True)
    return (y - mean) / jnp.sqrt(var + EPS) * gamma + beta


def _run_case(key, batch, channels, patch):
    k_x, k_w, k_p0, k_p1 = jax.random.split(key, 4)
    seq_len = patch * patch
    x = jax.random.normal(k_x, (batch, seq_len, channels), dtype=jnp.float32)
    perm_keys = jax.random.split(k_p0, batch)
    sorted_index = jnp.stack(
        [jax.random.permutation(perm_keys[i], seq_len) for i in range(batch)]
    ).astype(jnp.int32)
    conv_w = jax.random.normal(
        k_w, (channels, channels, 3, 3), dtype=jnp.float32) * 0.1
    gamma = jnp.ones((channels,), dtype=jnp.float32)
    beta = jnp.zeros((channels,), dtype=jnp.float32)

    out = downsample_layer(x, sorted_index, conv_w, gamma, beta,
                           patch_size=patch)
    out = jax.block_until_ready(out)

    ref = reference(x, sorted_index, conv_w, gamma, beta, patch)
    ho = wo = (patch + 1) // 2
    assert out.shape == (batch, ho, wo, channels), out.shape
    max_err = float(jnp.max(jnp.abs(out - ref)))
    assert jnp.allclose(out, ref, atol=2e-4, rtol=2e-4), max_err
    return max_err


if __name__ == "__main__":
    key = jax.random.PRNGKey(0)
    k0, k1 = jax.random.split(key, 2)

    # Primary small config (even spatial size).
    _run_case(k0, batch=2, channels=4, patch=16)
    # Odd output width exercises the Wo -> Wop padding path.
    _run_case(k1, batch=2, channels=4, patch=14)

    print("KERNEL_OK")
</pallas_src>

<mosaic_0001>
module attributes {stable_mosaic.version = 11 : i64} {
  func.func @kernel(%arg0: i32, %arg1: i32, %arg2: memref<1x64x12xf32, #tpu.memory_space<vmem>>, %arg3: memref<1x8x12xf32, #tpu.memory_space<vmem>>, %arg4: memref<1x64x12xf32, #tpu.memory_space<vmem>>, %arg5: memref<3x12x4xf32, #tpu.memory_space<vmem>>, %arg6: memref<1x4xf32, #tpu.memory_space<vmem>>, %arg7: memref<1x4xf32, #tpu.memory_space<vmem>>, %arg8: memref<1x64x4xf32, #tpu.memory_space<vmem>>, %arg9: memref<64x4xf32, #tpu.memory_space<vmem>>) attributes {dimension_semantics = [#tpu.dimension_semantics<parallel>, #tpu.dimension_semantics<parallel>], iteration_bounds = array<i64: 2, 1>, scalar_prefetch = 0 : i64, scratch_operands = 1 : i64, tpu.core_type = #tpu.core_type<tc>, window_params = [{transform_indices = @transform_0, window_bounds = array<i64: 1, 64, 12>}, {transform_indices = @transform_1, window_bounds = array<i64: 1, 8, 12>}, {transform_indices = @transform_2, window_bounds = array<i64: 1, 64, 12>}, {pipeline_mode = #tpu.pipeline_mode<synchronous>, transform_indices = @transform_3, window_bounds = array<i64: 3, 12, 4>}, {pipeline_mode = #tpu.pipeline_mode<synchronous>, transform_indices = @transform_4, window_bounds = array<i64: 1, 4>}, {pipeline_mode = #tpu.pipeline_mode<synchronous>, transform_indices = @transform_5, window_bounds = array<i64: 1, 4>}, {transform_indices = @transform_6, window_bounds = array<i64: 1, 64, 4>}]} {
    %c0 = arith.constant 0 : index
    %c0_0 = arith.constant 0 : index
    %c0_1 = arith.constant 0 : index
    %0 = vector.load %arg2[%c0, %c0_0, %c0_1] : memref<1x64x12xf32, #tpu.memory_space<vmem>>, vector<1x64x12xf32>
    %1 = vector.shape_cast %0 : vector<1x64x12xf32> to vector<64x12xf32>
    %c0_2 = arith.constant 0 : index
    %c0_3 = arith.constant 0 : index
    %c0_4 = arith.constant 0 : index
    %2 = vector.load %arg4[%c0_2, %c0_3, %c0_4] : memref<1x64x12xf32, #tpu.memory_space<vmem>>, vector<1x64x12xf32>
    %3 = vector.shape_cast %2 : vector<1x64x12xf32> to vector<64x12xf32>
    %c0_5 = arith.constant 0 : index
    %c0_6 = arith.constant 0 : index
    %c0_7 = arith.constant 0 : index
    %4 = vector.load %arg3[%c0_5, %c0_6, %c0_7] : memref<1x8x12xf32, #tpu.memory_space<vmem>>, vector<1x8x12xf32>
    %5 = vector.shape_cast %4 : vector<1x8x12xf32> to vector<8x12xf32>
    %c0_8 = arith.constant 0 : index
    %c0_9 = arith.constant 0 : index
    %c0_10 = arith.constant 0 : index
    %6 = vector.load %arg5[%c0_8, %c0_9, %c0_10] : memref<3x12x4xf32, #tpu.memory_space<vmem>>, vector<1x12x4xf32>
    %7 = vector.shape_cast %6 : vector<1x12x4xf32> to vector<12x4xf32>
    %cst = arith.constant dense<0.000000e+00> : vector<64x4xf32>
    %8 = tpu.matmul %1, %7, %cst {dimension_numbers = #tpu.dot_dimension_numbers<[1], [0], [0], [1], [0, 0, 1, 1], [], []>} : vector<64x12xf32>, vector<12x4xf32>, vector<64x4xf32> -> vector<64x4xf32>
    %c0_11 = arith.constant 0 : index
    %c0_12 = arith.constant 0 : index
    %9 = vector.load %arg9[%c0_11, %c0_12] : memref<64x4xf32, #tpu.memory_space<vmem>>, vector<64x4xf32>
    tpu.vector_store %arg9[%c0_11, %c0_12], %8 {strides = array<i32>} : memref<64x4xf32, #tpu.memory_space<vmem>>, vector<64x4xf32>,
    %c0_13 = arith.constant 0 : index
    %c0_14 = arith.constant 0 : index
    %10 = vector.load %arg9[%c0_13, %c0_14] : memref<64x4xf32, #tpu.memory_space<vmem>>, vector<64x4xf32>
    %c1 = arith.constant 1 : index
    %c0_15 = arith.constant 0 : index
    %c0_16 = arith.constant 0 : index
    %11 = vector.load %arg5[%c1, %c0_15, %c0_16] : memref<3x12x4xf32, #tpu.memory_space<vmem>>, vector<1x12x4xf32>
    %12 = vector.shape_cast %11 : vector<1x12x4xf32> to vector<12x4xf32>
    %cst_17 = arith.constant dense<0.000000e+00> : vector<64x4xf32>
    %13 = tpu.matmul %3, %12, %cst_17 {dimension_numbers = #tpu.dot_dimension_numbers<[1], [0], [0], [1], [0, 0, 1, 1], [], []>} : vector<64x12xf32>, vector<12x4xf32>, vector<64x4xf32> -> vector<64x4xf32>
    %14 = arith.addf %10, %13 : vector<64x4xf32>
    %c0_18 = arith.constant 0 : index
    %c0_19 = arith.constant 0 : index
    %15 = vector.load %arg9[%c0_18, %c0_19] : memref<64x4xf32, #tpu.memory_space<vmem>>, vector<64x4xf32>
    tpu.vector_store %arg9[%c0_18, %c0_19], %14 {strides = array<i32>} : memref<64x4xf32, #tpu.memory_space<vmem>>, vector<64x4xf32>,
    %c0_20 = arith.constant 0 : index
    %c0_21 = arith.constant 0 : index
    %16 = vector.load %arg9[%c0_20, %c0_21] : memref<64x4xf32, #tpu.memory_space<vmem>>, vector<56x4xf32>
    %17 = vector.extract_strided_slice %1 {offsets = [8, 0], sizes = [56, 12], strides = [1, 1]} : vector<64x12xf32> to vector<56x12xf32>
    %c2 = arith.constant 2 : index
    %c0_22 = arith.constant 0 : index
    %c0_23 = arith.constant 0 : index
    %18 = vector.load %arg5[%c2, %c0_22, %c0_23] : memref<3x12x4xf32, #tpu.memory_space<vmem>>, vector<1x12x4xf32>
    %19 = vector.shape_cast %18 : vector<1x12x4xf32> to vector<12x4xf32>
    %cst_24 = arith.constant dense<0.000000e+00> : vector<56x4xf32>
    %20 = tpu.matmul %17, %19, %cst_24 {dimension_numbers = #tpu.dot_dimension_numbers<[1], [0], [0], [1], [0, 0, 1, 1], [], []>} : vector<56x12xf32>, vector<12x4xf32>, vector<56x4xf32> -> vector<56x4xf32>
    %21 = arith.addf %16, %20 : vector<56x4xf32>
    %c0_25 = arith.constant 0 : index
    %c0_26 = arith.constant 0 : index
    %22 = vector.load %arg9[%c0_25, %c0_26] : memref<64x4xf32, #tpu.memory_space<vmem>>, vector<56x4xf32>
    tpu.vector_store %arg9[%c0_25, %c0_26], %21 {strides = array<i32>} : memref<64x4xf32, #tpu.memory_space<vmem>>, vector<56x4xf32>,
    %c56 = arith.constant 56 : index
    %c0_27 = arith.constant 0 : index
    %23 = vector.load %arg9[%c56, %c0_27] : memref<64x4xf32, #tpu.memory_space<vmem>>, vector<8x4xf32>
    %c2_28 = arith.constant 2 : index
    %c0_29 = arith.constant 0 : index
    %c0_30 = arith.constant 0 : index
    %24 = vector.load %arg5[%c2_28, %c0_29, %c0_30] : memref<3x12x4xf32, #tpu.memory_space<vmem>>, vector<1x12x4xf32>
    %25 = vector.shape_cast %24 : vector<1x12x4xf32> to vector<12x4xf32>
    %cst_31 = arith.constant dense<0.000000e+00> : vector<8x4xf32>
    %26 = tpu.matmul %5, %25, %cst_31 {dimension_numbers = #tpu.dot_dimension_numbers<[1], [0], [0], [1], [0, 0, 1, 1], [], []>} : vector<8x12xf32>, vector<12x4xf32>, vector<8x4xf32> -> vector<8x4xf32>
    %27 = arith.addf %23, %26 : vector<8x4xf32>
    %c56_32 = arith.constant 56 : index
    %c0_33 = arith.constant 0 : index
    %28 = vector.load %arg9[%c56_32, %c0_33] : memref<64x4xf32, #tpu.memory_space<vmem>>, vector<8x4xf32>
    tpu.vector_store %arg9[%c56_32, %c0_33], %27 {strides = array<i32>} : memref<64x4xf32, #tpu.memory_space<vmem>>, vector<8x4xf32>,
    %c0_34 = arith.constant 0 : index
    %c0_35 = arith.constant 0 : index
    %29 = vector.load %arg9[%c0_34, %c0_35] : memref<64x4xf32, #tpu.memory_space<vmem>>, vector<64x4xf32>
    %c0_36 = arith.constant 0 : index
    %c0_37 = arith.constant 0 : index
    %30 = vector.load %arg6[%c0_36, %c0_37] : memref<1x4xf32, #tpu.memory_space<vmem>>, vector<1x4xf32>
    %c0_38 = arith.constant 0 : index
    %c0_39 = arith.constant 0 : index
    %31 = vector.load %arg7[%c0_38, %c0_39] : memref<1x4xf32, #tpu.memory_space<vmem>>, vector<1x4xf32>
    %cst_40 = arith.constant dense<0.000000e+00> : vector<64xf32>
    %32 = vector.multi_reduction <add>, %29, %cst_40 [1] : vector<64x4xf32> to vector<64xf32>
    %33 = vector.shape_cast %32 : vector<64xf32> to vector<64x1xf32>
    %cst_41 = arith.constant 2.500000e-01 : f32
    %34 = vector.broadcast %cst_41 : f32 to vector<64x1xf32>
    %35 = arith.mulf %33, %34 : vector<64x1xf32>
    %36 = arith.mulf %29, %29 : vector<64x4xf32>
    %cst_42 = arith.constant dense<0.000000e+00> : vector<64xf32>
    %37 = vector.multi_reduction <add>, %36, %cst_42 [1] : vector<64x4xf32> to vector<64xf32>
    %38 = vector.shape_cast %37 : vector<64xf32> to vector<64x1xf32>
    %cst_43 = arith.constant 2.500000e-01 : f32
    %39 = vector.broadcast %cst_43 : f32 to vector<64x1xf32>
    %40 = arith.mulf %38, %39 : vector<64x1xf32>
    %41 = arith.mulf %35, %35 : vector<64x1xf32>
    %42 = arith.subf %40, %41 : vector<64x1xf32>
    %cst_44 = arith.constant 0.000000e+00 : f32
    %43 = vector.broadcast %cst_44 : f32 to vector<64x1xf32>
    %44 = arith.maximumf %42, %43 : vector<64x1xf32>
    %45 = vector.broadcast %35 : vector<64x1xf32> to vector<64x4xf32>
    %46 = arith.subf %29, %45 : vector<64x4xf32>
    %cst_45 = arith.constant 9.99999974E-6 : f32
    %47 = vector.broadcast %cst_45 : f32 to vector<64x1xf32>
    %48 = arith.addf %44, %47 : vector<64x1xf32>
    %49 = math.rsqrt %48 : vector<64x1xf32>
    %50 = vector.broadcast %49 : vector<64x1xf32> to vector<64x4xf32>
    %51 = arith.mulf %46, %50 : vector<64x4xf32>
    %52 = vector.broadcast %30 : vector<1x4xf32> to vector<64x4xf32>
    %53 = arith.mulf %51, %52 : vector<64x4xf32>
    %54 = vector.broadcast %31 : vector<1x4xf32> to vector<64x4xf32>
    %55 = arith.addf %53, %54 : vector<64x4xf32>
    %c0_46 = arith.constant 0 : index
    %c0_47 = arith.constant 0 : index
    %c0_48 = arith.constant 0 : index
    %56 = vector.load %arg8[%c0_46, %c0_47, %c0_48] : memref<1x64x4xf32, #tpu.memory_space<vmem>>, vector<1x64x4xf32>
    %57 = vector.shape_cast %56 : vector<1x64x4xf32> to vector<64x4xf32>
    %58 = vector.shape_cast %55 : vector<64x4xf32> to vector<1x64x4xf32>
    tpu.vector_store %arg8[%c0_46, %c0_47, %c0_48], %58 {strides = array<i32>} : memref<1x64x4xf32, #tpu.memory_space<vmem>>, vector<1x64x4xf32>,
    return
  }
  func.func @transform_0(%arg0: i32, %arg1: i32) -> (i32, i32, i32) {
    %c0_i32 = arith.constant 0 : i32
    %c0_i32_0 = arith.constant 0 : i32
    return %arg0, %arg1, %c0_i32 : i32, i32, i32
  }
  func.func @transform_1(%arg0: i32, %arg1: i32) -> (i32, i32, i32) {
    %c1_i32 = arith.constant 1 : i32
    %0 = arith.addi %arg1, %c1_i32 : i32
    %c8_i32 = arith.constant 8 : i32
    %1 = arith.muli %0, %c8_i32 : i32
    %c0_i32 = arith.constant 0 : i32
    %c0_i32_0 = arith.constant 0 : i32
    return %arg0, %1, %c0_i32 : i32, i32, i32
  }
  func.func @transform_2(%arg0: i32, %arg1: i32) -> (i32, i32, i32) {
    %c0_i32 = arith.constant 0 : i32
    %c0_i32_0 = arith.constant 0 : i32
    return %arg0, %arg1, %c0_i32 : i32, i32, i32
  }
  func.func @transform_3(%arg0: i32, %arg1: i32) -> (i32, i32, i32) {
    %c0_i32 = arith.constant 0 : i32
    %c0_i32_0 = arith.constant 0 : i32
    %c0_i32_1 = arith.constant 0 : i32
    %c0_i32_2 = arith.constant 0 : i32
    return %c0_i32, %c0_i32_0, %c0_i32_1 : i32, i32, i32
  }
  func.func @transform_4(%arg0: i32, %arg1: i32) -> (i32, i32) {
    %c0_i32 = arith.constant 0 : i32
    %c0_i32_0 = arith.constant 0 : i32
    %c0_i32_1 = arith.constant 0 : i32
    return %c0_i32, %c0_i32_0 : i32, i32
  }
  func.func @transform_5(%arg0: i32, %arg1: i32) -> (i32, i32) {
    %c0_i32 = arith.constant 0 : i32
    %c0_i32_0 = arith.constant 0 : i32
    %c0_i32_1 = arith.constant 0 : i32
    return %c0_i32, %c0_i32_0 : i32, i32
  }
  func.func @transform_6(%arg0: i32, %arg1: i32) -> (i32, i32, i32) {
    %c0_i32 = arith.constant 0 : i32
    %c0_i32_0 = arith.constant 0 : i32
    return %arg0, %arg1, %c0_i32 : i32, i32, i32
  }
}

</mosaic_0001>

<llo_original>
// kernel: downsample_layer.1
$region0: #{downsample_layer.1}
  #allocation0 [shape = 'u32[]', space=smem, size = 0x4, offset = 0x4, fixed_abs, tag = 'smem constant byte address 0x4 - core index']
  #allocation1 [shape = 'u32[72,128]{1,0:T(1,128)}', space=vmem, size = 0x9000, scoped, tag = 'internal scratch']
  #allocation2 [shape = 'f32[64,4]{1,0:T(8,128)}', space=vmem, size = 0x8000, scoped, tag = 'scratch operand']
  %s0 = inlined_call_operand.vmem [shape: f32[2,72,12], index: 0, kind: input, shape index: {}, may-alias: {0,1}]
  %s1 = inlined_call_operand.vmem [shape: f32[2,72,12], index: 1, kind: input, shape index: {}, may-alias: {0,1}]
  %s2 = inlined_call_operand.vmem [shape: f32[2,64,12], index: 2, kind: input, shape index: {}]
  %s3 = inlined_call_operand.vmem [shape: f32[3,12,4], index: 3, kind: input, shape index: {}]
  %s4 = inlined_call_operand.vmem [shape: f32[1,4], index: 4, kind: input, shape index: {}]
  %s5 = inlined_call_operand.vmem [shape: f32[1,4], index: 5, kind: input, shape index: {}]
  %s6 = inlined_call_operand.vmem [shape: f32[2,64,4], index: 6, kind: output, shape index: {}]
  %s7 = sld [smem:[#allocation0]]
  $region57: #{downsample_layer.1} parent=0
    _
  %s9 = ssub.s32 1, %s7
  %s10 = scalar_select 0, %s9, %s7
  loop: start=0, step=1, limit=4
  $region2: #{downsample_layer.1} parent=0 // loop_pre_header
    _
  $region3: #{downsample_layer.1} parent=0 // loop_header
    %s12 = sphi 0, %s16
    %p13 = scmp.ge.s32.totalorder %s12, 4
    %s19 = sphi 0, %s31
    %s20 = sphi 0, %s27
    %s21 = sphi 0, %s19
    %s22 = sphi 0, %s20
    %s23 = sphi 0, %s21
    %s24 = sphi 0, %s22
    %s36 = sphi 0, %s38
    %s39 = sphi 0, %s36
    %s40 = sphi 0, %s39
    %s56 = sphi 0, %s40
    %s68 = sphi 0, %s70
    %s71 = sphi 0, %s68
    %s72 = sphi 0, %s71
    %s88 = sphi 0, %s72
    %s96 = sphi 0, %s98
    %s99 = sphi 0, %s96
    %s100 = sphi 0, %s99
    %s116 = sphi 0, %s100
    %s120 = sphi 0, %s120
    %s122 = sphi 0, %s120
    %s123 = sphi 0, %s122
    %s137 = sphi 0, %s123
    %s141 = sphi 0, %s141
    %s143 = sphi 0, %s141
    %s144 = sphi 0, %s143
    %s158 = sphi 0, %s144
    %s162 = sphi 0, %s162
    %s164 = sphi 0, %s162
    %s165 = sphi 0, %s164
    %s179 = sphi 0, %s165
    %s187 = sphi 0, %s189
    %s190 = sphi 0, %s187
    %s191 = sphi 0, %s190
    %s207 = sphi 0, %s191
  $region4: #{downsample_layer.1} parent=0 // loop_header_branch
    %15 = sbr.rel (%p13) target = $region8
  $region5: #{downsample_layer.1} parent=0 // loop_body
    %s17 = ssub.s32 %s12, 1
    %s18 = ssub.s32 %s12, 2
    %s25 = sadd.s32 1, %s20
    %p26 = scmp.ge.s32.totalorder %s25, 1
    %s27 = scalar_select %p26, 0, %s25
    %s28 = sadd.s32 1, %s19
    %s29 = scalar_select %p26, %s28, %s19
    %p30 = scmp.ge.s32.totalorder %s29, 2
    %s31 = scalar_select %p30, 0, %s29
    %s32 = ssub.s32 %s19, %s31
    %s33 = ssub.s32 %s20, %s27
    %s34 = sor.u32 %s32, %s33
    %p35 = scmp.eq.s32.totalorder %s34, 0
    %s37 = sadd.s32 %s36, 1
    %s38 = scalar_select %p35, %s36, %s37
    %p41 = pneg %p35
    %p42 = scmp.eq.s32.totalorder %s12, 1
    %p43 = por %p41, %p42
    %p44 = scmp.ne.s32.totalorder %s36, %s39
    %p45 = scmp.eq.s32.totalorder %s12, 0
    %p46 = por %p44, %p45
    %p47 = scmp.ne.s32.totalorder %s36, %s39
    %p48 = scmp.eq.s32.totalorder %s17, 1
    %p49 = por %p47, %p48
    %p50 = scmp.ne.s32.totalorder %s39, %s40
    %p51 = scmp.eq.s32.totalorder %s17, 0
    %p52 = por %p50, %p51
    %p53 = scmp.ne.s32.totalorder %s39, %s40
    %p54 = scmp.eq.s32.totalorder %s18, 1
    %p55 = por %p53, %p54
    %p57 = scmp.ne.s32.totalorder %s40, %s56
    %p58 = scmp.eq.s32.totalorder %s18, 0
    %p59 = por %p57, %p58
    %s60 = sadd.s32 %s20, 1
    %s61 = smul.u32 %s60, 8
    %s62 = sadd.s32 %s27, 1
    %s63 = smul.u32 %s62, 8
    %s64 = ssub.s32 %s19, %s31
    %s65 = ssub.s32 %s61, %s63
    %s66 = sor.u32 %s64, %s65
    %p67 = scmp.eq.s32.totalorder %s66, 0
    %s69 = sadd.s32 %s68, 1
    %s70 = scalar_select %p67, %s68, %s69
    %p73 = pneg %p67
    %p74 = scmp.eq.s32.totalorder %s12, 1
    %p75 = por %p73, %p74
    %p76 = scmp.ne.s32.totalorder %s68, %s71
    %p77 = scmp.eq.s32.totalorder %s12, 0
    %p78 = por %p76, %p77
    %p79 = scmp.ne.s32.totalorder %s68, %s71
    %p80 = scmp.eq.s32.totalorder %s17, 1
    %p81 = por %p79, %p80
    %p82 = scmp.ne.s32.totalorder %s71, %s72
    %p83 = scmp.eq.s32.totalorder %s17, 0
    %p84 = por %p82, %p83
    %p85 = scmp.ne.s32.totalorder %s71, %s72
    %p86 = scmp.eq.s32.totalorder %s18, 1
    %p87 = por %p85, %p86
    %p89 = scmp.ne.s32.totalorder %s72, %s88
    %p90 = scmp.eq.s32.totalorder %s18, 0
    %p91 = por %p89, %p90
    %s92 = ssub.s32 %s19, %s31
    %s93 = ssub.s32 %s20, %s27
    %s94 = sor.u32 %s92, %s93
    %p95 = scmp.eq.s32.totalorder %s94, 0
    %s97 = sadd.s32 %s96, 1
    %s98 = scalar_select %p95, %s96, %s97
    %p101 = pneg %p95
    %p102 = scmp.eq.s32.totalorder %s12, 1
    %p103 = por %p101, %p102
    %p104 = scmp.ne.s32.totalorder %s96, %s99
    %p105 = scmp.eq.s32.totalorder %s12, 0
    %p106 = por %p104, %p105
    %p107 = scmp.ne.s32.totalorder %s96, %s99
    %p108 = scmp.eq.s32.totalorder %s17, 1
    %p109 = por %p107, %p108
    %p110 = scmp.ne.s32.totalorder %s99, %s100
    %p111 = scmp.eq.s32.totalorder %s17, 0
    %p112 = por %p110, %p111
    %p113 = scmp.ne.s32.totalorder %s99, %s100
    %p114 = scmp.eq.s32.totalorder %s18, 1
    %p115 = por %p113, %p114
    %p117 = scmp.ne.s32.totalorder %s100, %s116
    %p118 = scmp.eq.s32.totalorder %s18, 0
    %p119 = por %p117, %p118
    %s121 = sadd.s32 %s120, 1
    %p124 = scmp.eq.s32.totalorder %s12, 1
    %p125 = scmp.ne.s32.totalorder %s120, %s122
    %p126 = scmp.eq.s32.totalorder %s12, 0
    %p127 = por %p125, %p126
    %p128 = scmp.ne.s32.totalorder %s120, %s122
    %p129 = scmp.eq.s32.totalorder %s17, 1
    %p130 = por %p128, %p129
    %p131 = scmp.ne.s32.totalorder %s122, %s123
    %p132 = scmp.eq.s32.totalorder %s17, 0
    %p133 = por %p131, %p132
    %p134 = scmp.ne.s32.totalorder %s122, %s123
    %p135 = scmp.eq.s32.totalorder %s18, 1
    %p136 = por %p134, %p135
    %p138 = scmp.ne.s32.totalorder %s123, %s137
    %p139 = scmp.eq.s32.totalorder %s18, 0
    %p140 = por %p138, %p139
    %s142 = sadd.s32 %s141, 1
    %p145 = scmp.eq.s32.totalorder %s12, 1
    %p146 = scmp.ne.s32.totalorder %s141, %s143
    %p147 = scmp.eq.s32.totalorder %s12, 0
    %p148 = por %p146, %p147
    %p149 = scmp.ne.s32.totalorder %s141, %s143
    %p150 = scmp.eq.s32.totalorder %s17, 1
    %p151 = por %p149, %p150
    %p152 = scmp.ne.s32.totalorder %s143, %s144
    %p153 = scmp.eq.s32.totalorder %s17, 0
    %p154 = por %p152, %p153
    %p155 = scmp.ne.s32.totalorder %s143, %s144
    %p156 = scmp.eq.s32.totalorder %s18, 1
    %p157 = por %p155, %p156
    %p159 = scmp.ne.s32.totalorder %s144, %s158
    %p160 = scmp.eq.s32.totalorder %s18, 0
    %p161 = por %p159, %p160
    %s163 = sadd.s32 %s162, 1
    %p166 = scmp.eq.s32.totalorder %s12, 1
    %p167 = scmp.ne.s32.totalorder %s162, %s164
    %p168 = scmp.eq.s32.totalorder %s12, 0
    %p169 = por %p167, %p168
    %p170 = scmp.ne.s32.totalorder %s162, %s164
    %p171 = scmp.eq.s32.totalorder %s17, 1
    %p172 = por %p170, %p171
    %p173 = scmp.ne.s32.totalorder %s164, %s165
    %p174 = scmp.eq.s32.totalorder %s17, 0
    %p175 = por %p173, %p174
    %p176 = scmp.ne.s32.totalorder %s164, %s165
    %p177 = scmp.eq.s32.totalorder %s18, 1
    %p178 = por %p176, %p177
    %p180 = scmp.ne.s32.totalorder %s165, %s179
    %p181 = scmp.eq.s32.totalorder %s18, 0
    %p182 = por %p180, %p181
    %s183 = ssub.s32 %s19, %s31
    %s184 = ssub.s32 %s20, %s27
    %s185 = sor.u32 %s183, %s184
    %p186 = scmp.eq.s32.totalorder %s185, 0
    %s188 = sadd.s32 %s187, 1
    %s189 = scalar_select %p186, %s187, %s188
    %p192 = pneg %p186
    %p193 = scmp.eq.s32.totalorder %s12, 1
    %p194 = por %p192, %p193
    %p195 = scmp.ne.s32.totalorder %s187, %s190
    %p196 = scmp.eq.s32.totalorder %s12, 0
    %p197 = por %p195, %p196
    %p198 = scmp.ne.s32.totalorder %s187, %s190
    %p199 = scmp.eq.s32.totalorder %s17, 1
    %p200 = por %p198, %p199
    %p201 = scmp.ne.s32.totalorder %s190, %s191
    %p202 = scmp.eq.s32.totalorder %s17, 0
    %p203 = por %p201, %p202
    %p204 = scmp.ne.s32.totalorder %s190, %s191
    %p205 = scmp.eq.s32.totalorder %s18, 1
    %p206 = por %p204, %p205
    %p208 = scmp.ne.s32.totalorder %s191, %s207
    %p209 = scmp.eq.s32.totalorder %s18, 0
    %p210 = por %p208, %p209
    %p211 = scmp.le.s32.totalorder 1, %s12
    %p212 = scmp.lt.s32.totalorder %s12, 3
    %p213 = pnand %p211, %p212
    %p214 = pneg %p213
    // Predicated region
    $region9: #{downsample_layer.1} parent=5 // pred_check
      _
    $region10: #{downsample_layer.1} parent=5 // pred_check_branch
      %216 = sbr.rel (%p213) target = $region12
    $region11: #{downsample_layer.1} parent=5 // pred_region
      %s217 = ssub.s32 %s12, 1
      // Predicated region
      $region13: #{downsample_layer.1} parent=11 // pred_check
        %p218 = pneg %p133
      $region14: #{downsample_layer.1} parent=11 // pred_check_branch
        %220 = sbr.rel (%p218) target = $region16
      $region15: #{downsample_layer.1} parent=11 // pred_region
        _
      $region16: #{downsample_layer.1} parent=11 // pred_fallthru
        _
      // Predicated region
      $region17: #{downsample_layer.1} parent=11 // pred_check
        %p221 = pneg %p154
      $region18: #{downsample_layer.1} parent=11 // pred_check_branch
        %223 = sbr.rel (%p221) target = $region20
      $region19: #{downsample_layer.1} parent=11 // pred_region
        _
      $region20: #{downsample_layer.1} parent=11 // pred_fallthru
        _
      // Predicated region
      $region21: #{downsample_layer.1} parent=11 // pred_check
        %p224 = pneg %p175
      $region22: #{downsample_layer.1} parent=11 // pred_check_branch
        %226 = sbr.rel (%p224) target = $region24
      $region23: #{downsample_layer.1} parent=11 // pred_region
        _
      $region24: #{downsample_layer.1} parent=11 // pred_fallthru
        _
    $region12: #{downsample_layer.1} parent=5 // pred_fallthru
      _
    %p227 = scmp.lt.s32.totalorder %s12, 2
    // Predicated region
    $region25: #{downsample_layer.1} parent=5 // pred_check
      %p228 = pneg %p227
    $region26: #{downsample_layer.1} parent=5 // pred_check_branch
      %230 = sbr.rel (%p228) target = $region28
    $region27: #{downsample_layer.1} parent=5 // pred_region
      // Predicated region
      $region29: #{downsample_layer.1} parent=27 // pred_check
        %p231 = pneg %p46
      $region30: #{downsample_layer.1} parent=27 // pred_check_branch
        %233 = sbr.rel (%p231) target = $region32
      $region31: #{downsample_layer.1} parent=27 // pred_region
        %s234 = smul.u32 8, %s20
        %s235 = ssub.s32 9, %s234
        %p236 = scmp.lt.s32.totalorder %s235, 8
        %s237 = scalar_select %p236, %s235, 8
        %s238 = smul.u32 8, %s237
        %p239 = scmp.lt.s32.totalorder %s19, 1
        %s240 = scalar_select %p239, %s19, 1
        %p241 = scmp.lt.s32.totalorder %s234, 8
        %s242 = scalar_select %p241, %s234, 8
        %s243 = smul.addr %s240, 9
        %s244 = sadd.s32 %s242, %s243
        %s245 = smul.addr %s244, 8
        %s246 = scalar_lea.vmem %s0, %s245
        %s247 = smul.u32 8, %s20
        %s248 = ssub.s32 9, %s247
        %p249 = scmp.lt.s32.totalorder %s248, 8
        %s250 = scalar_select %p249, %s248, 8
        %s251 = smul.u32 8, %s250
      $region32: #{downsample_layer.1} parent=27 // pred_fallthru
        _
      // Predicated region
      $region33: #{downsample_layer.1} parent=27 // pred_check
        %p252 = pneg %p78
      $region34: #{downsample_layer.1} parent=27 // pred_check_branch
        %254 = sbr.rel (%p252) target = $region36
      $region35: #{downsample_layer.1} parent=27 // pred_region
        %s255 = sadd.s32 %s20, 1
        %s256 = smul.u32 %s255, 8
        %p257 = scmp.lt.s32.totalorder %s19, 1
        %s258 = scalar_select %p257, %s19, 1
        %p259 = scmp.lt.s32.totalorder %s256, 8
        %s260 = scalar_select %p259, %s256, 8
        %s261 = smul.addr %s258, 9
        %s262 = sadd.s32 %s260, %s261
        %s263 = smul.addr %s262, 8
        %s264 = scalar_lea.vmem %s1, %s263
        %s265 = sadd.s32 %s20, 1
        %s266 = smul.u32 %s265, 8
      $region36: #{downsample_layer.1} parent=27 // pred_fallthru
        _
      // Predicated region
      $region37: #{downsample_layer.1} parent=27 // pred_check
        %p267 = pneg %p106
      $region38: #{downsample_layer.1} parent=27 // pred_check_branch
        %269 = sbr.rel (%p267) target = $region40
      $region39: #{downsample_layer.1} parent=27 // pred_region
        %s270 = smul.u32 8, %s20
        %p271 = scmp.lt.s32.totalorder %s19, 1
        %s272 = scalar_select %p271, %s19, 1
        %p273 = scmp.lt.s32.totalorder %s270, 7
        %s274 = scalar_select %p273, %s270, 7
        %s275 = smul.addr %s272, 8
        %s276 = sadd.s32 %s274, %s275
        %s277 = smul.addr %s276, 8
        %s278 = scalar_lea.vmem %s2, %s277
        %s279 = smul.u32 8, %s20
      $region40: #{downsample_layer.1} parent=27 // pred_fallthru
        _
    $region28: #{downsample_layer.1} parent=5 // pred_fallthru
      _
    %p280 = scmp.le.s32.totalorder 1, %s12
    %p281 = scmp.lt.s32.totalorder %s12, 3
    %p282 = pnand %p280, %p281
    %p283 = pneg %p282
    // Predicated region
    $region41: #{downsample_layer.1} parent=5 // pred_check
      _
    $region42: #{downsample_layer.1} parent=5 // pred_check_branch
      %285 = sbr.rel (%p282) target = $region44
    $region43: #{downsample_layer.1} parent=5 // pred_region
      %s286 = ssub.s32 %s12, 1
      %s287 = smul.u32 8, %s22
      %s288 = ssub.s32 9, %s287
      %p289 = scmp.lt.s32.totalorder %s288, 8
      %s290 = scalar_select %p289, %s288, 8
      %s291 = smul.u32 8, %s290
      %p292 = scmp.lt.s32.totalorder %s21, 1
      %s293 = scalar_select %p292, %s21, 1
      %p294 = scmp.lt.s32.totalorder %s287, 8
      %s295 = scalar_select %p294, %s287, 8
      %s296 = smul.addr %s293, 9
      %s297 = sadd.s32 %s295, %s296
      %s298 = smul.addr %s297, 8
      %s299 = scalar_lea.vmem %s0, %s298
      %p300 = pneg %p52
      %p301 = pneg %p49
      %s302 = sadd.s32 %s22, 1
      %s303 = smul.u32 %s302, 8
      %p304 = scmp.lt.s32.totalorder %s21, 1
      %s305 = scalar_select %p304, %s21, 1
      %p306 = scmp.lt.s32.totalorder %s303, 8
      %s307 = scalar_select %p306, %s303, 8
      %s308 = smul.addr %s305, 9
      %s309 = sadd.s32 %s307, %s308
      %s310 = smul.addr %s309, 8
      %s311 = scalar_lea.vmem %s1, %s310
      %p312 = pneg %p84
      %p313 = pneg %p81
      %s314 = smul.u32 8, %s22
      %p315 = scmp.lt.s32.totalorder %s21, 1
      %s316 = scalar_select %p315, %s21, 1
      %p317 = scmp.lt.s32.totalorder %s314, 7
      %s318 = scalar_select %p317, %s314, 7
      %s319 = smul.addr %s316, 8
      %s320 = sadd.s32 %s318, %s319
      %s321 = smul.addr %s320, 8
      %s322 = scalar_lea.vmem %s2, %s321
      %p323 = pneg %p112
      %p324 = pneg %p109
      %p325 = pneg %p133
      %p326 = pneg %p130
      %p327 = pneg %p154
      %p328 = pneg %p151
      %p329 = pneg %p175
      %p330 = pneg %p172
      %p331 = pneg %p203
      %p332 = pneg %p200
      %s333 = smul.u32 8, %s22
      %p334 = scmp.lt.s32.totalorder %s21, 1
      %s335 = scalar_select %p334, %s21, 1
      %p336 = scmp.lt.s32.totalorder %s333, 7
      %s337 = scalar_select %p336, %s333, 7
      %s338 = smul.addr %s335, 8
      %s339 = sadd.s32 %s337, %s338
      %s340 = smul.addr %s339, 8
      %s341 = scalar_lea.vmem %s6, %s340
      %s342 = smul.u32 8, %s22
      %s343 = ssub.s32 9, %s342
      %p344 = scmp.lt.s32.totalorder %s343, 8
      %s345 = scalar_select %p344, %s343, 8
      %s346 = smul.u32 8, %s345
      %p347 = scmp.lt.s32.totalorder %s21, 1
      %s348 = scalar_select %p347, %s21, 1
      %p349 = scmp.lt.s32.totalorder %s342, 8
      %s350 = scalar_select %p349, %s342, 8
      %s351 = smul.addr %s348, 9
      %s352 = sadd.s32 %s350, %s351
      %s353 = smul.addr %s352, 8
      %s354 = scalar_lea.vmem %s0, %s353
      %s355 = smul.u32 8, %s22
      %s356 = ssub.s32 9, %s355
      %p357 = scmp.lt.s32.totalorder %s356, 8
      %s358 = scalar_select %p357, %s356, 8
      %s359 = smul.u32 8, %s358
      %s360 = sadd.s32 %s22, 1
      %s361 = smul.u32 %s360, 8
      %p362 = scmp.lt.s32.totalorder %s21, 1
      %s363 = scalar_select %p362, %s21, 1
      %p364 = scmp.lt.s32.totalorder %s361, 8
      %s365 = scalar_select %p364, %s361, 8
      %s366 = smul.addr %s363, 9
      %s367 = sadd.s32 %s365, %s366
      %s368 = smul.addr %s367, 8
      %s369 = scalar_lea.vmem %s1, %s368
      %s370 = sadd.s32 %s22, 1
      %s371 = smul.u32 %s370, 8
      %s372 = smul.u32 8, %s22
      %p373 = scmp.lt.s32.totalorder %s21, 1
      %s374 = scalar_select %p373, %s21, 1
      %p375 = scmp.lt.s32.totalorder %s372, 7
      %s376 = scalar_select %p375, %s372, 7
      %s377 = smul.addr %s374, 8
      %s378 = sadd.s32 %s376, %s377
      %s379 = smul.addr %s378, 8
      %s380 = scalar_lea.vmem %s2, %s379
      %s381 = smul.u32 8, %s22
      %s382 = smul.u32 8, %s22
      %p383 = scmp.lt.s32.totalorder %s21, 1
      %s384 = scalar_select %p383, %s21, 1
      %p385 = scmp.lt.s32.totalorder %s382, 7
      %s386 = scalar_select %p385, %s382, 7
      %s387 = smul.addr %s384, 8
      %s388 = sadd.s32 %s386, %s387
      %s389 = smul.addr %s388, 8
      %s390 = scalar_lea.vmem %s6, %s389
      %s391 = smul.u32 8, %s22
      %v392 = vld [vmem:[%s354] sm:$0xff]
      %v393 = vld [vmem:[%s354 + $0x8] sm:$0xff]
      %v394 = vld [vmem:[%s354 + $0x10] sm:$0xff]
      %v395 = vld [vmem:[%s354 + $0x18] sm:$0xff]
      %v396 = vld [vmem:[%s354 + $0x20] sm:$0xff]
      %v397 = vld [vmem:[%s354 + $0x28] sm:$0xff]
      %v398 = vld [vmem:[%s354 + $0x30] sm:$0xff]
      %v399 = vld [vmem:[%s354 + $0x38] sm:$0xff]
      %v400 = vld [vmem:[%s380] sm:$0xff]
      %v401 = vld [vmem:[%s380 + $0x8] sm:$0xff]
      %v402 = vld [vmem:[%s380 + $0x10] sm:$0xff]
      %v403 = vld [vmem:[%s380 + $0x18] sm:$0xff]
      %v404 = vld [vmem:[%s380 + $0x20] sm:$0xff]
      %v405 = vld [vmem:[%s380 + $0x28] sm:$0xff]
      %v406 = vld [vmem:[%s380 + $0x30] sm:$0xff]
      %v407 = vld [vmem:[%s380 + $0x38] sm:$0xff]
      %v408 = vld [vmem:[%s369] sm:$0xff]
      %v409 = vld [vmem:[%s3] sm:$0xff]
      %v410 = vld [vmem:[%s3 + $0x8] sm:$0xf]
      %vm411 = vcmask 97280
      %v413 = vsel %vm411, %v392, 0
      %v416 = vsel %vm411, %v393, 0
      %v419 = vsel %vm411, %v394, 0
      %v422 = vsel %vm411, %v395, 0
      %v425 = vsel %vm411, %v396, 0
      %v428 = vsel %vm411, %v397, 0
      %v431 = vsel %vm411, %v398, 0
      %v434 = vsel %vm411, %v399, 0
      %vm436 = vcmask 1043456
      %v438 = vsel %vm436, %v410, 0
      %440 = vmatpush.msra.mxu0 0.0
      %441 = vmatpush.msra.mxu0 0.0
      %442 = vmatpush.msra.mxu0 0.0
      %443 = vmatpush.msra.mxu0 0.0
      %444 = vmatpush.msra.mxu0 0.0
      %445 = vmatpush.msra.mxu0 0.0
      %446 = vmatpush.msra.mxu0 0.0
      %447 = vmatpush.msra.mxu0 0.0
      %448 = vmatpush.msra.mxu0 0.0
      %449 = vmatpush.msra.mxu0 0.0
      %450 = vmatpush.msra.mxu0 0.0
      %451 = vmatpush.msra.mxu0 0.0
      %452 = vmatpush.msra.mxu0 0.0
      %453 = vmatpush.msra.mxu0 0.0
      %454 = vmatpush.msra.mxu0 %v438
      %455 = vmatpush.msra.mxu0 %v409
      %456 = vmatmul.f32.gmra.mxu0 %v413
      %v457 = vpop.f32.mrf.mxu0
      %v458 = vadd.f32 0.0, %v457
      %459 = vmatmul.f32.gmra.mxu0 %v416
      %v460 = vpop.f32.mrf.mxu0
      %v461 = vadd.f32 0.0, %v460
      %462 = vmatmul.f32.gmra.mxu0 %v419
      %v463 = vpop.f32.mrf.mxu0
      %v464 = vadd.f32 0.0, %v463
      %465 = vmatmul.f32.gmra.mxu0 %v422
      %v466 = vpop.f32.mrf.mxu0
      %v467 = vadd.f32 0.0, %v466
      %468 = vmatmul.f32.gmra.mxu0 %v425
      %v469 = vpop.f32.mrf.mxu0
      %v470 = vadd.f32 0.0, %v469
      %471 = vmatmul.f32.gmra.mxu0 %v428
      %v472 = vpop.f32.mrf.mxu0
      %v473 = vadd.f32 0.0, %v472
      %474 = vmatmul.f32.gmra.mxu0 %v431
      %v475 = vpop.f32.mrf.mxu0
      %v476 = vadd.f32 0.0, %v475
      %477 = vmatmul.f32.gmra.mxu0 %v434
      %v478 = vpop.f32.mrf.mxu0
      %v479 = vadd.f32 0.0, %v478
      %480 = vdwg.mxu0
      %vm481 = vcmask 31744
      %482 = vst.msk [vmem:[#allocation2] sm:$0xff] %vm481, %v458
      %483 = vst.msk [vmem:[#allocation2 + $0x8] sm:$0xff] %vm481, %v461
      %484 = vst.msk [vmem:[#allocation2 + $0x10] sm:$0xff] %vm481, %v464
      %485 = vst.msk [vmem:[#allocation2 + $0x18] sm:$0xff] %vm481, %v467
      %486 = vst.msk [vmem:[#allocation2 + $0x20] sm:$0xff] %vm481, %v470
      %487 = vst.msk [vmem:[#allocation2 + $0x28] sm:$0xff] %vm481, %v473
      %488 = vst.msk [vmem:[#allocation2 + $0x30] sm:$0xff] %vm481, %v476
      %489 = vst.msk [vmem:[#allocation2 + $0x38] sm:$0xff] %vm481, %v479
      %v490 = vld [vmem:[#allocation2] sm:$0xff]
      %v491 = vld [vmem:[#allocation2 + $0x8] sm:$0xff]
      %v492 = vld [vmem:[#allocation2 + $0x10] sm:$0xff]
      %v493 = vld [vmem:[#allocation2 + $0x18] sm:$0xff]
      %v494 = vld [vmem:[#allocation2 + $0x20] sm:$0xff]
      %v495 = vld [vmem:[#allocation2 + $0x28] sm:$0xff]
      %v496 = vld [vmem:[#allocation2 + $0x30] sm:$0xff]
      %v497 = vld [vmem:[#allocation2 + $0x38] sm:$0xff]
      %s498 = scalar_lea.vmem %s3, 16
      %v499 = vld [vmem:[%s498] sm:$0xff]
      %v500 = vld [vmem:[%s498 + $0x8] sm:$0xf]
      %v502 = vsel %vm411, %v400, 0
      %v505 = vsel %vm411, %v401, 0
      %v508 = vsel %vm411, %v402, 0
      %v511 = vsel %vm411, %v403, 0
      %v514 = vsel %vm411, %v404, 0
      %v517 = vsel %vm411, %v405, 0
      %v520 = vsel %vm411, %v406, 0
      %v523 = vsel %vm411, %v407, 0
      %v526 = vsel %vm436, %v500, 0
      %528 = vmatpush.msra.mxu0 0.0
      %529 = vmatpush.msra.mxu0 0.0
      %530 = vmatpush.msra.mxu0 0.0
      %531 = vmatpush.msra.mxu0 0.0
      %532 = vmatpush.msra.mxu0 0.0
      %533 = vmatpush.msra.mxu0 0.0
      %534 = vmatpush.msra.mxu0 0.0
      %535 = vmatpush.msra.mxu0 0.0
      %536 = vmatpush.msra.mxu0 0.0
      %537 = vmatpush.msra.mxu0 0.0
      %538 = vmatpush.msra.mxu0 0.0
      %539 = vmatpush.msra.mxu0 0.0
      %540 = vmatpush.msra.mxu0 0.0
      %541 = vmatpush.msra.mxu0 0.0
      %542 = vmatpush.msra.mxu0 %v526
      %543 = vmatpush.msra.mxu0 %v499
      %544 = vmatmul.f32.gmra.mxu0 %v502
      %v545 = vpop.f32.mrf.mxu0
      %v546 = vadd.f32 0.0, %v545
      %547 = vmatmul.f32.gmra.mxu0 %v505
      %v548 = vpop.f32.mrf.mxu0
      %v549 = vadd.f32 0.0, %v548
      %550 = vmatmul.f32.gmra.mxu0 %v508
      %v551 = vpop.f32.mrf.mxu0
      %v552 = vadd.f32 0.0, %v551
      %553 = vmatmul.f32.gmra.mxu0 %v511
      %v554 = vpop.f32.mrf.mxu0
      %v555 = vadd.f32 0.0, %v554
      %556 = vmatmul.f32.gmra.mxu0 %v514
      %v557 = vpop.f32.mrf.mxu0
      %v558 = vadd.f32 0.0, %v557
      %559 = vmatmul.f32.gmra.mxu0 %v517
      %v560 = vpop.f32.mrf.mxu0
      %v561 = vadd.f32 0.0, %v560
      %562 = vmatmul.f32.gmra.mxu0 %v520
      %v563 = vpop.f32.mrf.mxu0
      %v564 = vadd.f32 0.0, %v563
      %565 = vmatmul.f32.gmra.mxu0 %v523
      %v566 = vpop.f32.mrf.mxu0
      %v567 = vadd.f32 0.0, %v566
      %568 = vdwg.mxu0
      %v569 = vadd.f32 %v490, %v546
      %v570 = vadd.f32 %v491, %v549
      %v571 = vadd.f32 %v492, %v552
      %v572 = vadd.f32 %v493, %v555
      %v573 = vadd.f32 %v494, %v558
      %v574 = vadd.f32 %v495, %v561
      %v575 = vadd.f32 %v496, %v564
      %v576 = vadd.f32 %v497, %v567
      %577 = vst.msk [vmem:[#allocation2] sm:$0xff] %vm481, %v569
      %578 = vst.msk [vmem:[#allocation2 + $0x8] sm:$0xff] %vm481, %v570
      %579 = vst.msk [vmem:[#allocation2 + $0x10] sm:$0xff] %vm481, %v571
      %580 = vst.msk [vmem:[#allocation2 + $0x18] sm:$0xff] %vm481, %v572
      %581 = vst.msk [vmem:[#allocation2 + $0x20] sm:$0xff] %vm481, %v573
      %582 = vst.msk [vmem:[#allocation2 + $0x28] sm:$0xff] %vm481, %v574
      %583 = vst.msk [vmem:[#allocation2 + $0x30] sm:$0xff] %vm481, %v575
      %584 = vst.msk [vmem:[#allocation2 + $0x38] sm:$0xff] %vm481, %v576
      %v585 = vld [vmem:[#allocation2] sm:$0xff]
      %v586 = vld [vmem:[#allocation2 + $0x8] sm:$0xff]
      %v587 = vld [vmem:[#allocation2 + $0x10] sm:$0xff]
      %v588 = vld [vmem:[#allocation2 + $0x18] sm:$0xff]
      %v589 = vld [vmem:[#allocation2 + $0x20] sm:$0xff]
      %v590 = vld [vmem:[#allocation2 + $0x28] sm:$0xff]
      %v591 = vld [vmem:[#allocation2 + $0x30] sm:$0xff]
      %s592 = scalar_lea.vmem %s3, 32
      %v593 = vld [vmem:[%s592] sm:$0xff]
      %v594 = vld [vmem:[%s592 + $0x8] sm:$0xf]
      %v596 = vsel %vm436, %v594, 0
      %598 = vmatpush.msra.mxu0 0.0
      %599 = vmatpush.msra.mxu0 0.0
      %600 = vmatpush.msra.mxu0 0.0
      %601 = vmatpush.msra.mxu0 0.0
      %602 = vmatpush.msra.mxu0 0.0
      %603 = vmatpush.msra.mxu0 0.0
      %604 = vmatpush.msra.mxu0 0.0
      %605 = vmatpush.msra.mxu0 0.0
      %606 = vmatpush.msra.mxu0 0.0
      %607 = vmatpush.msra.mxu0 0.0
      %608 = vmatpush.msra.mxu0 0.0
      %609 = vmatpush.msra.mxu0 0.0
      %610 = vmatpush.msra.mxu0 0.0
      %611 = vmatpush.msra.mxu0 0.0
      %612 = vmatpush.msra.mxu0 %v596
      %613 = vmatpush.msra.mxu0 %v593
      %614 = vmatmul.f32.gmra.mxu0 %v416
      %v615 = vpop.f32.mrf.mxu0
      %v616 = vadd.f32 0.0, %v615
      %617 = vmatmul.f32.gmra.mxu0 %v419
      %v618 = vpop.f32.mrf.mxu0
      %v619 = vadd.f32 0.0, %v618
      %620 = vmatmul.f32.gmra.mxu0 %v422
      %v621 = vpop.f32.mrf.mxu0
      %v622 = vadd.f32 0.0, %v621
      %623 = vmatmul.f32.gmra.mxu0 %v425
      %v624 = vpop.f32.mrf.mxu0
      %v625 = vadd.f32 0.0, %v624
      %626 = vmatmul.f32.gmra.mxu0 %v428
      %v627 = vpop.f32.mrf.mxu0
      %v628 = vadd.f32 0.0, %v627
      %629 = vmatmul.f32.gmra.mxu0 %v431
      %v630 = vpop.f32.mrf.mxu0
      %v631 = vadd.f32 0.0, %v630
      %632 = vmatmul.f32.gmra.mxu0 %v434
      %v633 = vpop.f32.mrf.mxu0
      %v634 = vadd.f32 0.0, %v633
      %635 = vdwg.mxu0
      %v636 = vadd.f32 %v585, %v616
      %v637 = vadd.f32 %v586, %v619
      %v638 = vadd.f32 %v587, %v622
      %v639 = vadd.f32 %v588, %v625
      %v640 = vadd.f32 %v589, %v628
      %v641 = vadd.f32 %v590, %v631
      %v642 = vadd.f32 %v591, %v634
      %643 = vst.msk [vmem:[#allocation2] sm:$0xff] %vm481, %v636
      %644 = vst.msk [vmem:[#allocation2 + $0x8] sm:$0xff] %vm481, %v637
      %645 = vst.msk [vmem:[#allocation2 + $0x10] sm:$0xff] %vm481, %v638
      %646 = vst.msk [vmem:[#allocation2 + $0x18] sm:$0xff] %vm481, %v639
      %647 = vst.msk [vmem:[#allocation2 + $0x20] sm:$0xff] %vm481, %v640
      %648 = vst.msk [vmem:[#allocation2 + $0x28] sm:$0xff] %vm481, %v641
      %649 = vst.msk [vmem:[#allocation2 + $0x30] sm:$0xff] %vm481, %v642
      %v650 = vld [vmem:[#allocation2 + $0x38] sm:$0xff]
      %v651 = vld [vmem:[%s592] sm:$0xff]
      %v652 = vld [vmem:[%s592 + $0x8] sm:$0xf]
      %v654 = vsel %vm411, %v408, 0
      %v657 = vsel %vm436, %v652, 0
      %659 = vmatpush.msra.mxu0 0.0
      %660 = vmatpush.msra.mxu0 0.0
      %661 = vmatpush.msra.mxu0 0.0
      %662 = vmatpush.msra.mxu0 0.0
      %663 = vmatpush.msra.mxu0 0.0
      %664 = vmatpush.msra.mxu0 0.0
      %665 = vmatpush.msra.mxu0 0.0
      %666 = vmatpush.msra.mxu0 0.0
      %667 = vmatpush.msra.mxu0 0.0
      %668 = vmatpush.msra.mxu0 0.0
      %669 = vmatpush.msra.mxu0 0.0
      %670 = vmatpush.msra.mxu0 0.0
      %671 = vmatpush.msra.mxu0 0.0
      %672 = vmatpush.msra.mxu0 0.0
      %673 = vmatpush.msra.mxu0 %v657
      %674 = vmatpush.msra.mxu0 %v651
      %675 = vmatmul.f32.gmra.mxu0 %v654
      %v676 = vpop.f32.mrf.mxu0
      %v677 = vadd.f32 0.0, %v676
      %678 = vdwg.mxu0
      %v679 = vadd.f32 %v650, %v677
      %680 = vst.msk [vmem:[#allocation2 + $0x38] sm:$0xff] %vm481, %v679
      %v681 = vld [vmem:[#allocation2] sm:$0xff]
      %v682 = vld [vmem:[#allocation2 + $0x8] sm:$0xff]
      %v683 = vld [vmem:[#allocation2 + $0x10] sm:$0xff]
      %v684 = vld [vmem:[#allocation2 + $0x18] sm:$0xff]
      %v685 = vld [vmem:[#allocation2 + $0x20] sm:$0xff]
      %v686 = vld [vmem:[#allocation2 + $0x28] sm:$0xff]
      %v687 = vld [vmem:[#allocation2 + $0x30] sm:$0xff]
      %v688 = vld [vmem:[#allocation2 + $0x38] sm:$0xff]
      %v689 = vld [vmem:[%s4] sm:$0x1]
      %v690 = vld [vmem:[%s5] sm:$0x1]
      %v691 = vsel %vm481, %v681, 0.0
      %692 = vadd.xlane.f32.xlu0 %v691
      %v693 = vpop.xlane.xlu0 %692
      %v694 = vsel %vm481, %v682, 0.0
      %695 = vadd.xlane.f32.xlu0 %v694
      %v696 = vpop.xlane.xlu0 %695
      %v697 = vsel %vm481, %v683, 0.0
      %698 = vadd.xlane.f32.xlu0 %v697
      %v699 = vpop.xlane.xlu0 %698
      %v700 = vsel %vm481, %v684, 0.0
      %701 = vadd.xlane.f32.xlu0 %v700
      %v702 = vpop.xlane.xlu0 %701
      %v703 = vsel %vm481, %v685, 0.0
      %704 = vadd.xlane.f32.xlu0 %v703
      %v705 = vpop.xlane.xlu0 %704
      %v706 = vsel %vm481, %v686, 0.0
      %707 = vadd.xlane.f32.xlu0 %v706
      %v708 = vpop.xlane.xlu0 %707
      %v709 = vsel %vm481, %v687, 0.0
      %710 = vadd.xlane.f32.xlu0 %v709
      %v711 = vpop.xlane.xlu0 %710
      %v712 = vsel %vm481, %v688, 0.0
      %713 = vadd.xlane.f32.xlu0 %v712
      %v714 = vpop.xlane.xlu0 %713
      %v715 = vmul.f32 %v693, 0.25
      %v716 = vmul.f32 %v696, 0.25
      %v717 = vmul.f32 %v699, 0.25
      %v718 = vmul.f32 %v702, 0.25
      %v719 = vmul.f32 %v705, 0.25
      %v720 = vmul.f32 %v708, 0.25
      %v721 = vmul.f32 %v711, 0.25
      %v722 = vmul.f32 %v714, 0.25
      %v723 = vmul.f32 %v681, %v681
      %v724 = vmul.f32 %v682, %v682
      %v725 = vmul.f32 %v683, %v683
      %v726 = vmul.f32 %v684, %v684
      %v727 = vmul.f32 %v685, %v685
      %v728 = vmul.f32 %v686, %v686
      %v729 = vmul.f32 %v687, %v687
      %v730 = vmul.f32 %v688, %v688
      %v731 = vsel %vm481, %v723, 0.0
      %732 = vadd.xlane.f32.xlu0 %v731
      %v733 = vpop.xlane.xlu0 %732
      %v734 = vsel %vm481, %v724, 0.0
      %735 = vadd.xlane.f32.xlu0 %v734
      %v736 = vpop.xlane.xlu0 %735
      %v737 = vsel %vm481, %v725, 0.0
      %738 = vadd.xlane.f32.xlu0 %v737
      %v739 = vpop.xlane.xlu0 %738
      %v740 = vsel %vm481, %v726, 0.0
      %741 = vadd.xlane.f32.xlu0 %v740
      %v742 = vpop.xlane.xlu0 %741
      %v743 = vsel %vm481, %v727, 0.0
      %744 = vadd.xlane.f32.xlu0 %v743
      %v745 = vpop.xlane.xlu0 %744
      %v746 = vsel %vm481, %v728, 0.0
      %747 = vadd.xlane.f32.xlu0 %v746
      %v748 = vpop.xlane.xlu0 %747
      %v749 = vsel %vm481, %v729, 0.0
      %750 = vadd.xlane.f32.xlu0 %v749
      %v751 = vpop.xlane.xlu0 %750
      %v752 = vsel %vm481, %v730, 0.0
      %753 = vadd.xlane.f32.xlu0 %v752
      %v754 = vpop.xlane.xlu0 %753
      %v755 = vmul.f32 %v733, 0.25
      %v756 = vmul.f32 %v736, 0.25
      %v757 = vmul.f32 %v739, 0.25
      %v758 = vmul.f32 %v742, 0.25
      %v759 = vmul.f32 %v745, 0.25
      %v760 = vmul.f32 %v748, 0.25
      %v761 = vmul.f32 %v751, 0.25
      %v762 = vmul.f32 %v754, 0.25
      %v763 = vmul.f32 %v715, %v715
      %v764 = vmul.f32 %v716, %v716
      %v765 = vmul.f32 %v717, %v717
      %v766 = vmul.f32 %v718, %v718
      %v767 = vmul.f32 %v719, %v719
      %v768 = vmul.f32 %v720, %v720
      %v769 = vmul.f32 %v721, %v721
      %v770 = vmul.f32 %v722, %v722
      %v771 = vsub.f32 %v755, %v763
      %v772 = vsub.f32 %v756, %v764
      %v773 = vsub.f32 %v757, %v765
      %v774 = vsub.f32 %v758, %v766
      %v775 = vsub.f32 %v759, %v767
      %v776 = vsub.f32 %v760, %v768
      %v777 = vsub.f32 %v761, %v769
      %v778 = vsub.f32 %v762, %v770
      %v779 = vmax.f32 %v771, 0.0
      %v780 = vmax.f32 %v772, 0.0
      %v781 = vmax.f32 %v773, 0.0
      %v782 = vmax.f32 %v774, 0.0
      %v783 = vmax.f32 %v775, 0.0
      %v784 = vmax.f32 %v776, 0.0
      %v785 = vmax.f32 %v777, 0.0
      %v786 = vmax.f32 %v778, 0.0
      %v787 = vsub.f32 %v681, %v715
      %v788 = vsub.f32 %v682, %v716
      %v789 = vsub.f32 %v683, %v717
      %v790 = vsub.f32 %v684, %v718
      %v791 = vsub.f32 %v685, %v719
      %v792 = vsub.f32 %v686, %v720
      %v793 = vsub.f32 %v687, %v721
      %v794 = vsub.f32 %v688, %v722
      %v795 = vadd.f32 %v779, 1e-05
      %v796 = vadd.f32 %v780, 1e-05
      %v797 = vadd.f32 %v781, 1e-05
      %v798 = vadd.f32 %v782, 1e-05
      %v799 = vadd.f32 %v783, 1e-05
      %v800 = vadd.f32 %v784, 1e-05
      %v801 = vadd.f32 %v785, 1e-05
      %v802 = vadd.f32 %v786, 1e-05
      %v803 = vrsqrt.pop %v795
      %v804 = vmul.f32 %v803, %v795
      %v805 = vmul.f32 %v804, %v803
      %v806 = vmul.f32 0.5, %v805
      %v807 = vsub.f32 1.5, %v806
      %v808 = vmul.f32 %v803, %v807
      %vm809 = vweird.f32 %v795
      %vm810 = vweird.f32 %v803
      %vm811 = vmor %vm809, %vm810
      %v812 = vsel %vm811, %v803, %v808
      %v813 = vrsqrt.pop %v796
      %v814 = vmul.f32 %v813, %v796
      %v815 = vmul.f32 %v814, %v813
      %v816 = vmul.f32 0.5, %v815
      %v817 = vsub.f32 1.5, %v816
      %v818 = vmul.f32 %v813, %v817
      %vm819 = vweird.f32 %v796
      %vm820 = vweird.f32 %v813
      %vm821 = vmor %vm819, %vm820
      %v822 = vsel %vm821, %v813, %v818
      %v823 = vrsqrt.pop %v797
      %v824 = vmul.f32 %v823, %v797
      %v825 = vmul.f32 %v824, %v823
      %v826 = vmul.f32 0.5, %v825
      %v827 = vsub.f32 1.5, %v826
      %v828 = vmul.f32 %v823, %v827
      %vm829 = vweird.f32 %v797
      %vm830 = vweird.f32 %v823
      %vm831 = vmor %vm829, %vm830
      %v832 = vsel %vm831, %v823, %v828
      %v833 = vrsqrt.pop %v798
      %v834 = vmul.f32 %v833, %v798
      %v835 = vmul.f32 %v834, %v833
      %v836 = vmul.f32 0.5, %v835
      %v837 = vsub.f32 1.5, %v836
      %v838 = vmul.f32 %v833, %v837
      %vm839 = vweird.f32 %v798
      %vm840 = vweird.f32 %v833
      %vm841 = vmor %vm839, %vm840
      %v842 = vsel %vm841, %v833, %v838
      %v843 = vrsqrt.pop %v799
      %v844 = vmul.f32 %v843, %v799
      %v845 = vmul.f32 %v844, %v843
      %v846 = vmul.f32 0.5, %v845
      %v847 = vsub.f32 1.5, %v846
      %v848 = vmul.f32 %v843, %v847
      %vm849 = vweird.f32 %v799
      %vm850 = vweird.f32 %v843
      %vm851 = vmor %vm849, %vm850
      %v852 = vsel %vm851, %v843, %v848
      %v853 = vrsqrt.pop %v800
      %v854 = vmul.f32 %v853, %v800
      %v855 = vmul.f32 %v854, %v853
      %v856 = vmul.f32 0.5, %v855
      %v857 = vsub.f32 1.5, %v856
      %v858 = vmul.f32 %v853, %v857
      %vm859 = vweird.f32 %v800
      %vm860 = vweird.f32 %v853
      %vm861 = vmor %vm859, %vm860
      %v862 = vsel %vm861, %v853, %v858
      %v863 = vrsqrt.pop %v801
      %v864 = vmul.f32 %v863, %v801
      %v865 = vmul.f32 %v864, %v863
      %v866 = vmul.f32 0.5, %v865
      %v867 = vsub.f32 1.5, %v866
      %v868 = vmul.f32 %v863, %v867
      %vm869 = vweird.f32 %v801
      %vm870 = vweird.f32 %v863
      %vm871 = vmor %vm869, %vm870
      %v872 = vsel %vm871, %v863, %v868
      %v873 = vrsqrt.pop %v802
      %v874 = vmul.f32 %v873, %v802
      %v875 = vmul.f32 %v874, %v873
      %v876 = vmul.f32 0.5, %v875
      %v877 = vsub.f32 1.5, %v876
      %v878 = vmul.f32 %v873, %v877
      %vm879 = vweird.f32 %v802
      %vm880 = vweird.f32 %v873
      %vm881 = vmor %vm879, %vm880
      %v882 = vsel %vm881, %v873, %v878
      %v883 = vmul.f32 %v787, %v812
      %v884 = vmul.f32 %v788, %v822
      %v885 = vmul.f32 %v789, %v832
      %v886 = vmul.f32 %v790, %v842
      %v887 = vmul.f32 %v791, %v852
      %v888 = vmul.f32 %v792, %v862
      %v889 = vmul.f32 %v793, %v872
      %v890 = vmul.f32 %v794, %v882
      %v892 = vperm.slane %v689, 0
      %v894 = vmul.f32 %v883, %v892
      %v895 = vmul.f32 %v884, %v892
      %v896 = vmul.f32 %v885, %v892
      %v897 = vmul.f32 %v886, %v892
      %v898 = vmul.f32 %v887, %v892
      %v899 = vmul.f32 %v888, %v892
      %v900 = vmul.f32 %v889, %v892
      %v901 = vmul.f32 %v890, %v892
      %v903 = vperm.slane %v690, 0
      %v905 = vadd.f32 %v894, %v903
      %v906 = vadd.f32 %v895, %v903
      %v907 = vadd.f32 %v896, %v903
      %v908 = vadd.f32 %v897, %v903
      %v909 = vadd.f32 %v898, %v903
      %v910 = vadd.f32 %v899, %v903
      %v911 = vadd.f32 %v900, %v903
      %v912 = vadd.f32 %v901, %v903
      %913 = vst.msk [vmem:[%s390] sm:$0xff] %vm481, %v905
      %914 = vst.msk [vmem:[%s390 + $0x8] sm:$0xff] %vm481, %v906
      %915 = vst.msk [vmem:[%s390 + $0x10] sm:$0xff] %vm481, %v907
      %916 = vst.msk [vmem:[%s390 + $0x18] sm:$0xff] %vm481, %v908
      %917 = vst.msk [vmem:[%s390 + $0x20] sm:$0xff] %vm481, %v909
      %918 = vst.msk [vmem:[%s390 + $0x28] sm:$0xff] %vm481, %v910
      %919 = vst.msk [vmem:[%s390 + $0x30] sm:$0xff] %vm481, %v911
      %920 = vst.msk [vmem:[%s390 + $0x38] sm:$0xff] %vm481, %v912
      %s921 = smul.u32 8, %s22
      %p922 = scmp.lt.s32.totalorder %s21, 1
      %s923 = scalar_select %p922, %s21, 1
      %p924 = scmp.lt.s32.totalorder %s921, 7
      %s925 = scalar_select %p924, %s921, 7
      %s926 = smul.addr %s923, 8
      %s927 = sadd.s32 %s925, %s926
      %s928 = smul.addr %s927, 8
      %s929 = scalar_lea.vmem %s6, %s928
      // Predicated region
      $region45: #{downsample_layer.1} parent=43 // pred_check
        %p930 = pneg %p200
      $region46: #{downsample_layer.1} parent=43 // pred_check_branch
        %932 = sbr.rel (%p930) target = $region48
      $region47: #{downsample_layer.1} parent=43 // pred_region
        %s933 = smul.u32 8, %s22
      $region48: #{downsample_layer.1} parent=43 // pred_fallthru
        _
    $region44: #{downsample_layer.1} parent=5 // pred_fallthru
      _
    %p934 = scmp.le.s32.totalorder 2, %s12
    // Predicated region
    $region49: #{downsample_layer.1} parent=5 // pred_check
      %p935 = pneg %p934
    $region50: #{downsample_layer.1} parent=5 // pred_check_branch
      %937 = sbr.rel (%p935) target = $region52
    $region51: #{downsample_layer.1} parent=5 // pred_region
      %s938 = ssub.s32 %s12, 2
      // Predicated region
      $region53: #{downsample_layer.1} parent=51 // pred_check
        %p939 = pneg %p206
      $region54: #{downsample_layer.1} parent=51 // pred_check_branch
        %941 = sbr.rel (%p939) target = $region56
      $region55: #{downsample_layer.1} parent=51 // pred_region
        %s942 = smul.u32 8, %s24
        %p943 = scmp.lt.s32.totalorder %s23, 1
        %s944 = scalar_select %p943, %s23, 1
        %p945 = scmp.lt.s32.totalorder %s942, 7
        %s946 = scalar_select %p945, %s942, 7
        %s947 = smul.addr %s944, 8
        %s948 = sadd.s32 %s946, %s947
        %s949 = smul.addr %s948, 8
        %s950 = scalar_lea.vmem %s6, %s949
      $region56: #{downsample_layer.1} parent=51 // pred_fallthru
        _
    $region52: #{downsample_layer.1} parent=5 // pred_fallthru
      _
  $region6: #{downsample_layer.1} parent=0 // loop_footer
    %s16 = sadd.s32 1, %s12
  $region7: #{downsample_layer.1} parent=0 // loop_footer_branch
    %11 = sbr.rel target = $region3
  $region8: #{downsample_layer.1} parent=0 // loop_exit
    _

</llo_original>
